<compile_context>
chip_gen: v7x
topology: tpu7x:2x2x1
jax: 0.10.0
libtpu: 0.0.40
codegen_flags: <defaults>
</compile_context>

<pallas_src>
import jax
import jax.numpy as jnp
from jax import lax
from jax.experimental import pallas as pl
from jax.experimental.pallas import tpu as pltpu

IN_FEATURES = 512
OUT_FEATURES = 2


def _default_block_b():
    """Per-generation batch tile: 2048 on v5-class parts (small scoped-VMEM
    default), 4096 on v6e / v7x."""
    try:
        kind = jax.devices()[0].device_kind.lower()
    except Exception:
        return 2048
    if "v5" in kind:
        return 2048
    return 4096


def _x_block_spec(tb, num_steps):
    """x tile spec; request 3-deep buffering when there are enough grid steps
    for it to matter and the installed API supports `pipeline_mode`."""
    index_map = lambda i: (i, 0)
    if num_steps >= 3:
        buffered = getattr(pl, "Buffered", None)
        if buffered is not None:
            try:
                return pl.BlockSpec((tb, IN_FEATURES), index_map,
                                    pipeline_mode=buffered(3))
            except TypeError:
                pass
    return pl.BlockSpec((tb, IN_FEATURES), index_map)


def classifier_kernel(x_ref, w_ref, b_ref, o_ref):
    # x_ref: (TB, 512)  w_ref: (2, 512) pre-normalized  b_ref: (2, 1)  o_ref: (2, TB)
    x = x_ref[...]                                    # keep input dtype for the MXU
    w = w_ref[...].astype(x.dtype)
    out = lax.dot_general(                            # contract feature dim of both operands
        w, x,                                         # -> (2, TB): batch on the lane axis
        dimension_numbers=(((1,), (1,)), ((), ())),
        preferred_element_type=jnp.float32,
    )
    out = out + b_ref[...].astype(jnp.float32)        # (2, 1) broadcast over lanes
    o_ref[...] = out.astype(o_ref.dtype)


def _normalize_weight(weight):
    # l2_norm(weight, axis=0): divide each column by its L2 norm over the 2 rows
    # (plain divide, no eps clamp, matching the PyTorch reference).
    w32 = weight.astype(jnp.float32)
    norm = jnp.sqrt(jnp.sum(w32 * w32, axis=0, keepdims=True))
    return (w32 / norm).astype(weight.dtype)


def classifier_forward(x, weight, bias, *, block_b=None):
    """x: (B, 512), weight: (2, 512), bias: (2,) -> (B, 2)"""
    B, D = x.shape
    assert D == IN_FEATURES, f"expected {IN_FEATURES} features, got {D}"
    if block_b is None:
        block_b = _default_block_b()

    w_n = _normalize_weight(weight)                   # normalize once, outside the grid
    bias_col = bias.reshape(OUT_FEATURES, 1)

    if B <= block_b:
        tb, n_main = B, B                             # single full-array tile
    else:
        tb = block_b                                  # multiple of 8 / 128 by construction
        n_main = (B // tb) * tb                       # tail rows handled by XLA below

    pieces = []
    if n_main > 0:
        num_steps = n_main // tb
        itemsize = jnp.dtype(x.dtype).itemsize
        out_t = pl.pallas_call(
            classifier_kernel,
            out_shape=jax.ShapeDtypeStruct((OUT_FEATURES, n_main), x.dtype),
            grid=(num_steps,),
            in_specs=[
                _x_block_spec(tb, num_steps),                                 # x tiles (pipelined)
                pl.BlockSpec((OUT_FEATURES, IN_FEATURES), lambda i: (0, 0)),  # weight VMEM-resident
                pl.BlockSpec((OUT_FEATURES, 1), lambda i: (0, 0)),            # bias VMEM-resident
            ],
            out_specs=pl.BlockSpec((OUT_FEATURES, tb), lambda i: (0, i)),     # lane-dense output
            compiler_params=pltpu.CompilerParams(
                dimension_semantics=("parallel",),
                vmem_limit_bytes=48 * 1024 * 1024,
            ),
            cost_estimate=pl.CostEstimate(
                flops=2 * n_main * IN_FEATURES * OUT_FEATURES,
                transcendentals=0,
                bytes_accessed=(n_main * IN_FEATURES * itemsize
                                + n_main * OUT_FEATURES * itemsize
                                + OUT_FEATURES * IN_FEATURES
                                * jnp.dtype(w_n.dtype).itemsize),
            ),
        )(x, w_n, bias_col)
        pieces.append(out_t.T)                        # (n_main, 2) — tiny transpose

    if n_main < B:                                    # < tb leftover rows: tiny plain-XLA matmul
        x_tail = x[n_main:]
        tail = (jnp.dot(x_tail.astype(jnp.float32), w_n.astype(jnp.float32).T)
                + bias.astype(jnp.float32)).astype(x.dtype)
        pieces.append(tail)

    return pieces[0] if len(pieces) == 1 else jnp.concatenate(pieces, axis=0)


def reference_forward(x, weight, bias):
    w32 = weight.astype(jnp.float32)
    norm = jnp.sqrt(jnp.sum(w32 ** 2, axis=0, keepdims=True))
    w_n = w32 / norm
    return (jnp.dot(x.astype(jnp.float32), w_n.T)
            + bias.astype(jnp.float32)).astype(x.dtype)


if __name__ == "__main__":
    key = jax.random.PRNGKey(0)
    k_x, k_w, k_x2 = jax.random.split(key, 3)

    # Deterministic parameter init mirroring the module's __init__:
    #   weight ~ N(0, 0.01), bias = 0
    weight = 0.01 * jax.random.normal(
        k_w, (OUT_FEATURES, IN_FEATURES), dtype=jnp.float32)
    bias = jnp.zeros((OUT_FEATURES,), dtype=jnp.float32)

    # 1) Small-batch path: whole batch in one Pallas tile.
    B = 8
    x = jax.random.normal(k_x, (B, IN_FEATURES), dtype=jnp.float32)
    out = jax.block_until_ready(classifier_forward(x, weight, bias))
    ref = reference_forward(x, weight, bias)
    assert out.shape == (B, OUT_FEATURES)
    assert jnp.allclose(out, ref, atol=1e-4, rtol=1e-4), "mismatch (small batch)"

    # 2) Multi-tile path + un-padded XLA tail: B not a multiple of the tile.
    B2, tb2 = 456, 128                                # 3 Pallas tiles + 72-row tail
    x2 = jax.random.normal(k_x2, (B2, IN_FEATURES), dtype=jnp.float32)
    out2 = jax.block_until_ready(classifier_forward(x2, weight, bias, block_b=tb2))
    ref2 = reference_forward(x2, weight, bias)
    assert out2.shape == (B2, OUT_FEATURES)
    assert jnp.allclose(out2, ref2, atol=1e-4, rtol=1e-4), "mismatch (tiled + tail)"

    print("KERNEL_OK")
</pallas_src>

<mosaic_0001>
module attributes {stable_mosaic.version = 11 : i64} {
  func.func @classifier_kernel(%arg0: i32, %arg1: memref<8x512xf32, #tpu.memory_space<vmem>>, %arg2: memref<2x512xf32, #tpu.memory_space<vmem>>, %arg3: memref<2x1xf32, #tpu.memory_space<vmem>>, %arg4: memref<2x8xf32, #tpu.memory_space<vmem>>) attributes {dimension_semantics = [#tpu.dimension_semantics<parallel>], iteration_bounds = array<i64: 1>, scalar_prefetch = 0 : i64, scratch_operands = 0 : i64, tpu.core_type = #tpu.core_type<tc>, window_params = [{transform_indices = @transform_0, window_bounds = array<i64: 8, 512>}, {pipeline_mode = #tpu.pipeline_mode<synchronous>, transform_indices = @transform_1, window_bounds = array<i64: 2, 512>}, {pipeline_mode = #tpu.pipeline_mode<synchronous>, transform_indices = @transform_2, window_bounds = array<i64: 2, 1>}, {transform_indices = @transform_3, window_bounds = array<i64: 2, 8>}]} {
    %c0 = arith.constant 0 : index
    %c0_0 = arith.constant 0 : index
    %0 = vector.load %arg1[%c0, %c0_0] : memref<8x512xf32, #tpu.memory_space<vmem>>, vector<8x512xf32>
    %c0_1 = arith.constant 0 : index
    %c0_2 = arith.constant 0 : index
    %1 = vector.load %arg2[%c0_1, %c0_2] : memref<2x512xf32, #tpu.memory_space<vmem>>, vector<2x512xf32>
    %cst = arith.constant dense<0.000000e+00> : vector<2x8xf32>
    %2 = tpu.matmul %1, %0, %cst {dimension_numbers = #tpu.dot_dimension_numbers<[1], [1], [0], [0], [0, 0, 1, 0], [], []>} : vector<2x512xf32>, vector<8x512xf32>, vector<2x8xf32> -> vector<2x8xf32>
    %c0_3 = arith.constant 0 : index
    %c0_4 = arith.constant 0 : index
    %3 = vector.load %arg3[%c0_3, %c0_4] : memref<2x1xf32, #tpu.memory_space<vmem>>, vector<2x1xf32>
    %4 = vector.broadcast %3 : vector<2x1xf32> to vector<2x8xf32>
    %5 = arith.addf %2, %4 : vector<2x8xf32>
    %c0_5 = arith.constant 0 : index
    %c0_6 = arith.constant 0 : index
    %6 = vector.load %arg4[%c0_5, %c0_6] : memref<2x8xf32, #tpu.memory_space<vmem>>, vector<2x8xf32>
    tpu.vector_store %arg4[%c0_5, %c0_6], %5 {strides = array<i32>} : memref<2x8xf32, #tpu.memory_space<vmem>>, vector<2x8xf32>,
    return
  }
  func.func @transform_0(%arg0: i32) -> (i32, i32) {
    %c0_i32 = arith.constant 0 : i32
    %c0_i32_0 = arith.constant 0 : i32
    return %arg0, %c0_i32 : i32, i32
  }
  func.func @transform_1(%arg0: i32) -> (i32, i32) {
    %c0_i32 = arith.constant 0 : i32
    %c0_i32_0 = arith.constant 0 : i32
    %c0_i32_1 = arith.constant 0 : i32
    return %c0_i32, %c0_i32_0 : i32, i32
  }
  func.func @transform_2(%arg0: i32) -> (i32, i32) {
    %c0_i32 = arith.constant 0 : i32
    %c0_i32_0 = arith.constant 0 : i32
    %c0_i32_1 = arith.constant 0 : i32
    return %c0_i32, %c0_i32_0 : i32, i32
  }
  func.func @transform_3(%arg0: i32) -> (i32, i32) {
    %c0_i32 = arith.constant 0 : i32
    %c0_i32_0 = arith.constant 0 : i32
    return %c0_i32, %arg0 : i32, i32
  }
}

</mosaic_0001>

<llo_original>
// kernel: tpu_custom_call.1
$region0: #{tpu_custom_call.1}
  #allocation0 [shape = 'u32[]', space=smem, size = 0x4, offset = 0x4, fixed_abs, tag = 'smem constant byte address 0x4 - core index']
  #allocation1 [shape = 'u32[144,128]{1,0:T(1,128)}', space=vmem, size = 0x12000, scoped, tag = 'internal scratch']
  %s0 = inlined_call_operand.hbm [shape: f32[8,512], index: 0, kind: input, shape index: {}]
  %s1 = inlined_call_operand.hbm [shape: f32[2,512], index: 1, kind: input, shape index: {}]
  %s2 = inlined_call_operand.vmem [shape: f32[2,1], index: 2, kind: input, shape index: {}]
  %s3 = inlined_call_operand.hbm [shape: f32[2,8], index: 3, kind: output, shape index: {}]
  %s4 = sld [smem:[#allocation0]]
  $region30: #{tpu_custom_call.1} parent=0
    _
  %s6 = ssub.s32 1, %s4
  %s7 = scalar_select 0, %s6, %s4
  $region1: #{tpu_custom_call.1} parent=0
    #allocation2 [shape = 'u8[16384]{0}', space=vmem, size = 0x4000, scoped, tag = 'input window, operand 0, single buffered']
    #allocation3 [shape = 's32[1]{0}', space=sflag, size = 0x4, scoped, tag = 'scoped memory for tpu_custom_call.1']
    #allocation4 [shape = 's32[1]{0}', space=sflag, size = 0x4, scoped, tag = 'scoped memory for tpu_custom_call.1']
    #allocation5 [shape = 'u8[4096]{0}', space=vmem, size = 0x1000, scoped, tag = 'input window, operand 1, single buffered']
    #allocation6 [shape = 's32[1]{0}', space=sflag, size = 0x4, scoped, tag = 'scoped memory for tpu_custom_call.1']
    #allocation7 [shape = 'u8[1024]{0}', space=vmem, size = 0x400, scoped, tag = 'output window, operand 0, single buffered']
    %8 = vsyncpa [#allocation3], 0
    %9 = vsyncpa [#allocation6], 0
    %10 = vsyncpa [#allocation4], 0
    // Predicated region
    $region2: #{tpu_custom_call.1} parent=1 // pred_check
      _
    $region3: #{tpu_custom_call.1} parent=1 // pred_check_branch
      %12 = sbr.rel (0) target = $region5
    $region4: #{tpu_custom_call.1} parent=1 // pred_region
      %s14 = ssub.s32 512, 512
      %15 = vsyncadd [#allocation3], %s14
      %s17 = sshll.u32 [#allocation2], 4
      %s18 = int_to_ptr.vmem [resolvable:$true] %s17
      %20 = dma.hbm_to_vmem [thread:$0]  %s0, 512, %s18, [#allocation3]
    $region5: #{tpu_custom_call.1} parent=1 // pred_fallthru
      _
    // Predicated region
    $region6: #{tpu_custom_call.1} parent=1 // pred_check
      _
    $region7: #{tpu_custom_call.1} parent=1 // pred_check_branch
      %22 = sbr.rel (0) target = $region9
    $region8: #{tpu_custom_call.1} parent=1 // pred_region
      %s24 = ssub.s32 128, 128
      %25 = vsyncadd [#allocation6], %s24
      %s27 = sshll.u32 [#allocation5], 4
      %s28 = int_to_ptr.vmem [resolvable:$true] %s27
      %30 = dma.hbm_to_vmem [thread:$0]  %s1, 128, %s28, [#allocation6]
    $region9: #{tpu_custom_call.1} parent=1 // pred_fallthru
      _
    // Predicated region
    $region10: #{tpu_custom_call.1} parent=1 // pred_check
      _
    $region11: #{tpu_custom_call.1} parent=1 // pred_check_branch
      %32 = sbr.rel (0) target = $region13
    $region12: #{tpu_custom_call.1} parent=1 // pred_region
      _
    $region13: #{tpu_custom_call.1} parent=1 // pred_fallthru
      _
    // Predicated region
    $region14: #{tpu_custom_call.1} parent=1 // pred_check
      _
    $region15: #{tpu_custom_call.1} parent=1 // pred_check_branch
      %34 = sbr.rel (0) target = $region17
    $region16: #{tpu_custom_call.1} parent=1 // pred_region
      %35 = dma.done [#allocation3], 512
    $region17: #{tpu_custom_call.1} parent=1 // pred_fallthru
      _
    // Predicated region
    $region18: #{tpu_custom_call.1} parent=1 // pred_check
      _
    $region19: #{tpu_custom_call.1} parent=1 // pred_check_branch
      %37 = sbr.rel (0) target = $region21
    $region20: #{tpu_custom_call.1} parent=1 // pred_region
      %38 = dma.done [#allocation6], 128
    $region21: #{tpu_custom_call.1} parent=1 // pred_fallthru
      _
    %v39 = vld [vmem:[#allocation2] sm:$0xff]
    %v40 = vld [vmem:[#allocation2 + $0x8] sm:$0xff]
    %v41 = vld [vmem:[#allocation2 + $0x10] sm:$0xff]
    %v42 = vld [vmem:[#allocation2 + $0x18] sm:$0xff]
    %v43 = vld [vmem:[#allocation5] sm:$0xff]
    %v44 = vld [vmem:[%s2] sm:$0x3]
    %46 = vset.pattern.permute.xlu0 0
    %47 = vperm.xlu0 %46, %v44
    %v48 = vpop.permute.xlu0 %47
    %v51 = vcombine.high %v43, %v43
    %v53 = vunpack.c.l.s4 1983009808
    %v54 = vunpack.c.0.s8 %v53
    %v55 = vlaneseq
    %v56 = vshrl.u32 %v55, 7
    %v57 = vsub.s32 %v54, %v56
    %v58 = vrot.slane %v43, %v57
    %v60 = vunpack.c.l.s4 1983009808
    %v61 = vunpack.c.0.s8 %v60
    %v62 = vlaneseq
    %v63 = vshrl.u32 %v62, 7
    %v64 = vsub.s32 %v61, %v63
    %v65 = vrot.slane %v51, %v64
    %v66 = vcombine.high %v58, %v58
    %v67 = vcombine.high %v65, %v65
    %72 = vmatprep.subr.mxu0 %v40
    %73 = vmatpush1.xpose.msra.mxu0 %v39
    %74 = vmatprep.subr.mxu0 0.0
    %75 = vmatpush1.xpose.msra.mxu0 0.0
    %76 = vmatprep.subr.mxu0 0.0
    %77 = vmatpush1.xpose.msra.mxu0 0.0
    %78 = vmatprep.subr.mxu0 0.0
    %79 = vmatpush1.xpose.msra.mxu0 0.0
    %80 = vmatprep.subr.mxu0 0.0
    %81 = vmatpush1.xpose.msra.mxu0 0.0
    %82 = vmatprep.subr.mxu0 0.0
    %83 = vmatpush1.xpose.msra.mxu0 0.0
    %84 = vmatprep.subr.mxu0 0.0
    %85 = vmatpush1.xpose.msra.mxu0 0.0
    %86 = vmatprep.subr.mxu0 0.0
    %87 = vmatpush1.xpose.msra.mxu0 0.0
    %88 = vmatprep.subr.mxu0 0.0
    %89 = vmatpush1.xpose.msra.mxu0 0.0
    %90 = vmatprep.subr.mxu0 0.0
    %91 = vmatpush1.xpose.msra.mxu0 0.0
    %92 = vmatprep.subr.mxu0 0.0
    %93 = vmatpush1.xpose.msra.mxu0 0.0
    %94 = vmatprep.subr.mxu0 0.0
    %95 = vmatpush1.xpose.msra.mxu0 0.0
    %96 = vmatprep.subr.mxu0 0.0
    %97 = vmatpush1.xpose.msra.mxu0 0.0
    %98 = vmatprep.subr.mxu0 0.0
    %99 = vmatpush1.xpose.msra.mxu0 0.0
    %100 = vmatprep.subr.mxu0 0.0
    %101 = vmatpush1.xpose.msra.mxu0 0.0
    %102 = vmatprep.subr.mxu0 0.0
    %103 = vmatpush1.xpose.msra.mxu0 0.0
    %104 = vmatprep.subr.mxu0 0.0
    %105 = vmatpush1.xpose.msra.mxu0 0.0
    %106 = vmatprep.subr.mxu0 0.0
    %107 = vmatpush1.xpose.msra.mxu0 0.0
    %108 = vmatprep.subr.mxu0 0.0
    %109 = vmatpush1.xpose.msra.mxu0 0.0
    %110 = vmatprep.subr.mxu0 0.0
    %111 = vmatpush1.xpose.msra.mxu0 0.0
    %112 = vmatprep.subr.mxu0 0.0
    %113 = vmatpush1.xpose.msra.mxu0 0.0
    %114 = vmatprep.subr.mxu0 0.0
    %115 = vmatpush1.xpose.msra.mxu0 0.0
    %116 = vmatprep.subr.mxu0 0.0
    %117 = vmatpush1.xpose.msra.mxu0 0.0
    %118 = vmatprep.subr.mxu0 0.0
    %119 = vmatpush1.xpose.msra.mxu0 0.0
    %120 = vmatprep.subr.mxu0 0.0
    %121 = vmatpush1.xpose.msra.mxu0 0.0
    %122 = vmatprep.subr.mxu0 0.0
    %123 = vmatpush1.xpose.msra.mxu0 0.0
    %124 = vmatprep.subr.mxu0 0.0
    %125 = vmatpush1.xpose.msra.mxu0 0.0
    %126 = vmatprep.subr.mxu0 0.0
    %127 = vmatpush1.xpose.msra.mxu0 0.0
    %128 = vmatprep.subr.mxu0 0.0
    %129 = vmatpush1.xpose.msra.mxu0 0.0
    %130 = vmatprep.subr.mxu0 0.0
    %131 = vmatpush1.xpose.msra.mxu0 0.0
    %132 = vmatprep.subr.mxu0 0.0
    %133 = vmatpush1.xpose.msra.mxu0 0.0
    %134 = vmatprep.subr.mxu0 0.0
    %135 = vmatpush1.xpose.msra.mxu0 0.0
    %136 = vmatprep.mubr.f32.mxu0 %v66
    %137 = vmatmul.mubr.f32.gmra.mrb[0].mxu0 %v58
    %v138 = vpop.f32.mrb[0].mxu0
    %v139 = vadd.f32 %v48, %v138
    %v140 = vpop.f32.mrb[0].mxu0
    %141 = vdwg.mxu0
    %142 = vmatprep.subr.mxu0 %v42
    %143 = vmatpush1.xpose.msra.mxu0 %v41
    %144 = vmatprep.subr.mxu0 0.0
    %145 = vmatpush1.xpose.msra.mxu0 0.0
    %146 = vmatprep.subr.mxu0 0.0
    %147 = vmatpush1.xpose.msra.mxu0 0.0
    %148 = vmatprep.subr.mxu0 0.0
    %149 = vmatpush1.xpose.msra.mxu0 0.0
    %150 = vmatprep.subr.mxu0 0.0
    %151 = vmatpush1.xpose.msra.mxu0 0.0
    %152 = vmatprep.subr.mxu0 0.0
    %153 = vmatpush1.xpose.msra.mxu0 0.0
    %154 = vmatprep.subr.mxu0 0.0
    %155 = vmatpush1.xpose.msra.mxu0 0.0
    %156 = vmatprep.subr.mxu0 0.0
    %157 = vmatpush1.xpose.msra.mxu0 0.0
    %158 = vmatprep.subr.mxu0 0.0
    %159 = vmatpush1.xpose.msra.mxu0 0.0
    %160 = vmatprep.subr.mxu0 0.0
    %161 = vmatpush1.xpose.msra.mxu0 0.0
    %162 = vmatprep.subr.mxu0 0.0
    %163 = vmatpush1.xpose.msra.mxu0 0.0
    %164 = vmatprep.subr.mxu0 0.0
    %165 = vmatpush1.xpose.msra.mxu0 0.0
    %166 = vmatprep.subr.mxu0 0.0
    %167 = vmatpush1.xpose.msra.mxu0 0.0
    %168 = vmatprep.subr.mxu0 0.0
    %169 = vmatpush1.xpose.msra.mxu0 0.0
    %170 = vmatprep.subr.mxu0 0.0
    %171 = vmatpush1.xpose.msra.mxu0 0.0
    %172 = vmatprep.subr.mxu0 0.0
    %173 = vmatpush1.xpose.msra.mxu0 0.0
    %174 = vmatprep.subr.mxu0 0.0
    %175 = vmatpush1.xpose.msra.mxu0 0.0
    %176 = vmatprep.subr.mxu0 0.0
    %177 = vmatpush1.xpose.msra.mxu0 0.0
    %178 = vmatprep.subr.mxu0 0.0
    %179 = vmatpush1.xpose.msra.mxu0 0.0
    %180 = vmatprep.subr.mxu0 0.0
    %181 = vmatpush1.xpose.msra.mxu0 0.0
    %182 = vmatprep.subr.mxu0 0.0
    %183 = vmatpush1.xpose.msra.mxu0 0.0
    %184 = vmatprep.subr.mxu0 0.0
    %185 = vmatpush1.xpose.msra.mxu0 0.0
    %186 = vmatprep.subr.mxu0 0.0
    %187 = vmatpush1.xpose.msra.mxu0 0.0
    %188 = vmatprep.subr.mxu0 0.0
    %189 = vmatpush1.xpose.msra.mxu0 0.0
    %190 = vmatprep.subr.mxu0 0.0
    %191 = vmatpush1.xpose.msra.mxu0 0.0
    %192 = vmatprep.subr.mxu0 0.0
    %193 = vmatpush1.xpose.msra.mxu0 0.0
    %194 = vmatprep.subr.mxu0 0.0
    %195 = vmatpush1.xpose.msra.mxu0 0.0
    %196 = vmatprep.subr.mxu0 0.0
    %197 = vmatpush1.xpose.msra.mxu0 0.0
    %198 = vmatprep.subr.mxu0 0.0
    %199 = vmatpush1.xpose.msra.mxu0 0.0
    %200 = vmatprep.subr.mxu0 0.0
    %201 = vmatpush1.xpose.msra.mxu0 0.0
    %202 = vmatprep.subr.mxu0 0.0
    %203 = vmatpush1.xpose.msra.mxu0 0.0
    %204 = vmatprep.subr.mxu0 0.0
    %205 = vmatpush1.xpose.msra.mxu0 0.0
    %206 = vmatprep.mubr.f32.mxu0 %v67
    %207 = vmatmul.mubr.f32.gmra.mrb[0].mxu0 %v65
    %v208 = vpop.f32.mrb[0].mxu0
    %v209 = vadd.f32 %v139, %v208
    %v210 = vpop.f32.mrb[0].mxu0
    %211 = vdwg.mxu0
    %vm212 = vcmask 58368
    %213 = vst.msk [vmem:[#allocation7] sm:$0x3] %vm212, %v209
    // Predicated region
    $region22: #{tpu_custom_call.1} parent=1 // pred_check
      _
    $region23: #{tpu_custom_call.1} parent=1 // pred_check_branch
      %215 = sbr.rel (0) target = $region25
    $region24: #{tpu_custom_call.1} parent=1 // pred_region
      %s217 = ssub.s32 32, 32
      %218 = vsyncadd [#allocation4], %s217
      %s220 = sshll.u32 [#allocation7], 4
      %s221 = int_to_ptr.vmem [resolvable:$true] %s220
      %223 = dma.vmem_to_hbm [thread:$0]  %s221, 32, %s3, [#allocation4]
    $region25: #{tpu_custom_call.1} parent=1 // pred_fallthru
      _
    // Predicated region
    $region26: #{tpu_custom_call.1} parent=1 // pred_check
      _
    $region27: #{tpu_custom_call.1} parent=1 // pred_check_branch
      %225 = sbr.rel (0) target = $region29
    $region28: #{tpu_custom_call.1} parent=1 // pred_region
      %226 = dma.done [#allocation4], 32
    $region29: #{tpu_custom_call.1} parent=1 // pred_fallthru
      _
    %227 = vsyncpa [#allocation3], 1
    %228 = vsyncpa [#allocation6], 1
    %229 = vsyncpa [#allocation4], 1

</llo_original>
